<compile_context>
chip_gen: v7x
topology: tpu7x:2x2x1
jax: 0.10.0
libtpu: 0.0.40
codegen_flags: <defaults>
</compile_context>

<pallas_src>
import functools

import jax
import jax.numpy as jnp
from jax.experimental import pallas as pl
from jax.experimental.pallas import tpu as pltpu

EPS = 1e-5            # nn.BatchNorm2d default eps
LANE = 128


def _round_up(x, m):
    return (x + m - 1) // m * m


# ----------------------------------------------------------------------------
# scoped-VMEM budget: v5e/v6e have 128 MiB physical (use up to 64 MiB scoped);
# v7x has 64 MiB physical (stay at 32 MiB scoped).  Conservative fallback if
# the hardware query is unavailable.
# ----------------------------------------------------------------------------
def _default_vmem_limit():
    try:
        cap = pltpu.get_tpu_info().vmem_capacity_bytes
    except Exception:
        cap = 64 * 1024 * 1024
    return min(cap // 2, 96 * 1024 * 1024)


VMEM_LIMIT = _default_vmem_limit()
MM_BUDGET = int(VMEM_LIMIT * 0.75)   # leave headroom for compiler-internal scratch


# ----------------------------------------------------------------------------
# glue: im2col patch extraction (plain JAX)
# ----------------------------------------------------------------------------
def _im2col(x_nhwc, ksize, stride, pad):
    """Returns (N*Ho*Wo, ksize*ksize*C) patches, plus Ho, Wo."""
    N, H, W, C = x_nhwc.shape
    xp = jnp.pad(x_nhwc, ((0, 0), (pad, pad), (pad, pad), (0, 0)))
    Ho = (H + 2 * pad - ksize) // stride + 1
    Wo = (W + 2 * pad - ksize) // stride + 1
    cols = []
    for i in range(ksize):
        for j in range(ksize):
            cols.append(xp[:, i:i + stride * Ho:stride, j:j + stride * Wo:stride, :])
    p = jnp.concatenate(cols, axis=-1)  # (N, Ho, Wo, k*k*C), (i,j,c) minor order
    return p.reshape(N * Ho * Wo, ksize * ksize * C), Ho, Wo


# ----------------------------------------------------------------------------
# tile selection
# ----------------------------------------------------------------------------
def _choose_matmul_tiles(M, Kp, Cp, budget):
    """Resident-weight tiling: full-width N, K as deep as VMEM allows."""
    if Cp <= 512:
        TN = Cp
    elif Cp % 512 == 0:
        TN = 512
    elif Cp % 256 == 0:
        TN = 256
    else:
        TN = LANE

    def bytes_needed(tm, tk):
        # double-buffered p/w/y/stats blocks + f32 accumulator scratch
        return (2 * tm * tk * 2 + 2 * tk * TN * 2 + 2 * tm * TN * 2
                + tm * TN * 4 + 2 * 8 * TN * 4)

    if M >= 1024:
        tm_pref = 512
    elif M >= 512:
        tm_pref = 256   # keep >=2 parallel M tiles so both v7x TensorCores get work
    else:
        tm_pref = _round_up(M, 8)

    # Prefer a fully K-resident weight (kt == 1, nt == 1): the weight block index
    # is then constant across the whole grid and Pallas never re-fetches it.
    TK, TM = Kp, tm_pref
    while TM >= 256 and bytes_needed(TM, TK) > budget:
        TM //= 2
    if bytes_needed(TM, TK) > budget:
        TK, TM = 512, tm_pref          # fall back to 512-deep K (Kp padded up)
        while TM >= 256 and bytes_needed(TM, TK) > budget:
            TM //= 2
    return TM, TN, TK


def _choose_epilogue_tm(Mp, TM, row_bytes, budget):
    """Grow the streaming-epilogue M tile while it divides Mp and fits VMEM."""
    tm = TM
    while (tm * 2 <= 2048 and Mp % (tm * 2) == 0
           and 2 * (tm * 2) * row_bytes <= budget):
        tm *= 2
    return tm


# ----------------------------------------------------------------------------
# kernel A: tiled matmul (bf16 -> f32 acc) + per-M-tile BN partial statistics
# ----------------------------------------------------------------------------
def _matmul_stats_kernel_k1(p_ref, w_ref, y_ref, st_ref):
    # Single K step: weight tile == whole (padded) weight, resident across grid.
    acc = jnp.dot(p_ref[...], w_ref[...], preferred_element_type=jnp.float32)
    y_ref[...] = acc.astype(y_ref.dtype)
    st_ref[0:1, :] = jnp.sum(acc, axis=0, keepdims=True)
    st_ref[1:2, :] = jnp.sum(acc * acc, axis=0, keepdims=True)


def _matmul_stats_kernel(p_ref, w_ref, y_ref, st_ref, acc_ref):
    # grid = (M tiles, N tiles, K tiles); K is the last ("arbitrary") axis.
    @pl.when(pl.program_id(2) == 0)
    def _init():
        acc_ref[...] = jnp.zeros_like(acc_ref)

    acc_ref[...] += jnp.dot(p_ref[...], w_ref[...],
                            preferred_element_type=jnp.float32)

    @pl.when(pl.program_id(2) == pl.num_programs(2) - 1)
    def _finalize():
        acc = acc_ref[...]
        y_ref[...] = acc.astype(y_ref.dtype)
        st_ref[0:1, :] = jnp.sum(acc, axis=0, keepdims=True)
        st_ref[1:2, :] = jnp.sum(acc * acc, axis=0, keepdims=True)


def _matmul_with_stats(p, w, TM, TN, TK):
    Mp, Kp = p.shape
    Cp = w.shape[1]
    mt, nt, kt = Mp // TM, Cp // TN, Kp // TK
    if kt == 1:
        kernel, scratch = _matmul_stats_kernel_k1, []
    else:
        kernel = _matmul_stats_kernel
        scratch = [pltpu.VMEM((TM, TN), jnp.float32)]
    w_reads = 1 if (kt == 1 and nt == 1) else mt
    return pl.pallas_call(
        kernel,
        out_shape=(jax.ShapeDtypeStruct((Mp, Cp), jnp.bfloat16),
                   jax.ShapeDtypeStruct((8 * mt, Cp), jnp.float32)),
        grid_spec=pltpu.PrefetchScalarGridSpec(
            num_scalar_prefetch=0,
            grid=(mt, nt, kt),
            in_specs=[pl.BlockSpec((TM, TK), lambda i, j, k: (i, k)),
                      pl.BlockSpec((TK, TN), lambda i, j, k: (k, j))],
            out_specs=[pl.BlockSpec((TM, TN), lambda i, j, k: (i, j)),
                       pl.BlockSpec((8, TN), lambda i, j, k: (i, j))],
            scratch_shapes=scratch),
        compiler_params=pltpu.CompilerParams(
            dimension_semantics=("parallel", "parallel", "arbitrary"),
            vmem_limit_bytes=VMEM_LIMIT),
        cost_estimate=pl.CostEstimate(
            flops=2 * Mp * Kp * Cp,
            transcendentals=0,
            bytes_accessed=(Mp * Kp + Kp * Cp * w_reads) * 2
                           + Mp * Cp * 2 + 8 * mt * Cp * 4),
    )(p, w)


# ----------------------------------------------------------------------------
# kernel B: lane-dense streaming epilogue  y*scale + shift [+ residual] [+ ReLU]
# ----------------------------------------------------------------------------
def _bn_apply_kernel(y_ref, sc_ref, sh_ref, o_ref, *, relu):
    y = y_ref[...].astype(jnp.float32) * sc_ref[...] + sh_ref[...]
    if relu:
        y = jnp.maximum(y, 0.0)
    o_ref[...] = y.astype(o_ref.dtype)


def _bn_res_apply_kernel(y_ref, sc_ref, sh_ref, r_ref, o_ref, *, relu):
    y = (y_ref[...].astype(jnp.float32) * sc_ref[...] + sh_ref[...]
         + r_ref[...].astype(jnp.float32))
    if relu:
        y = jnp.maximum(y, 0.0)
    o_ref[...] = y.astype(o_ref.dtype)


def _bn_apply(y_raw, scale, shift, residual, relu, TM_E, out_dtype):
    Mp, Cp = y_raw.shape
    mt = Mp // TM_E
    args = [y_raw, scale.reshape(1, Cp), shift.reshape(1, Cp)]
    in_specs = [pl.BlockSpec((TM_E, Cp), lambda i: (i, 0)),
                pl.BlockSpec((1, Cp), lambda i: (0, 0)),   # resident across grid
                pl.BlockSpec((1, Cp), lambda i: (0, 0))]   # resident across grid
    if residual is not None:
        args.append(residual)
        in_specs.append(pl.BlockSpec((TM_E, Cp), lambda i: (i, 0)))
        kernel = functools.partial(_bn_res_apply_kernel, relu=relu)
    else:
        kernel = functools.partial(_bn_apply_kernel, relu=relu)
    # TODO(synk): alias the epilogue output onto y_raw (input_output_aliases)
    #             when dtypes match to drop the extra HBM allocation.
    return pl.pallas_call(
        kernel,
        out_shape=jax.ShapeDtypeStruct((Mp, Cp), out_dtype),
        grid_spec=pltpu.PrefetchScalarGridSpec(
            num_scalar_prefetch=0,
            grid=(mt,),
            in_specs=in_specs,
            out_specs=pl.BlockSpec((TM_E, Cp), lambda i: (i, 0))),
        compiler_params=pltpu.CompilerParams(
            dimension_semantics=("parallel",),
            vmem_limit_bytes=VMEM_LIMIT),
    )(*args)


# ----------------------------------------------------------------------------
# conv (im2col matmul) + training-mode BatchNorm [+ residual] [+ ReLU]
# ----------------------------------------------------------------------------
def _conv_bn(patches, w2d, gamma, beta, *, relu, residual=None,
             out_dtype=jnp.float32):
    M, K = patches.shape
    Cout = w2d.shape[1]

    Kp = _round_up(K, LANE)
    Cp = _round_up(Cout, LANE)
    TM, TN, TK = _choose_matmul_tiles(M, Kp, Cp, MM_BUDGET)
    Kp = _round_up(Kp, TK)     # keep the deep MXU feed lane-dense (no tiny-TK fallback)
    Mp = _round_up(M, TM)

    p = jnp.pad(patches.astype(jnp.bfloat16), ((0, Mp - M), (0, Kp - K)))
    w = jnp.pad(w2d, ((0, Kp - K), (0, Cp - Cout))).astype(jnp.bfloat16)

    # pass 1: MXU matmul (bf16 in, f32 acc), bf16 writeback + partial column stats
    y_raw, stats = _matmul_with_stats(p, w, TM, TN, TK)

    # tiny JAX reduction of partial stats -> BN scale/shift.  Padded rows and
    # columns of y are exactly zero, so dividing by the real M yields the true
    # batch statistics over (N, H, W); padded columns are sliced off later.
    st = stats.reshape(Mp // TM, 8, Cp)
    col_sum = jnp.sum(st[:, 0, :], axis=0)
    col_sq = jnp.sum(st[:, 1, :], axis=0)
    mean = col_sum / M
    # TODO(synk): switch to a per-tile-shifted sum-of-squares (Chan combine) to
    #             avoid cancellation when |mean| >> std on very deep layers.
    var = jnp.maximum(col_sq / M - mean * mean, 0.0)   # biased var (training BN)
    rstd = jax.lax.rsqrt(var + EPS)
    g = jnp.pad(gamma.reshape(-1).astype(jnp.float32), (0, Cp - Cout))
    b = jnp.pad(beta.reshape(-1).astype(jnp.float32), (0, Cp - Cout))
    scale = g * rstd
    shift = b - mean * scale

    r, res_bytes = None, 0
    if residual is not None:
        r = jnp.pad(residual.astype(jnp.bfloat16), ((0, Mp - M), (0, Cp - Cout)))
        res_bytes = 2

    # pass 2: big lane-dense streaming tiles, resident scale/shift
    out_bytes = 4 if out_dtype == jnp.float32 else 2
    row_bytes = Cp * (2 + res_bytes + out_bytes)
    TM_E = _choose_epilogue_tm(Mp, TM, row_bytes, MM_BUDGET)
    out = _bn_apply(y_raw, scale, shift, r, relu, TM_E, out_dtype)
    return out[:M, :Cout]


# ----------------------------------------------------------------------------
# ResidualBlock forward
# ----------------------------------------------------------------------------
def residual_block(x_nchw, params, stride):
    x = jnp.transpose(x_nchw, (0, 2, 3, 1)).astype(jnp.float32)  # NCHW -> NHWC
    N, H, W, Cin = x.shape
    Cout = params["w1"].shape[0]
    x_bf = x.astype(jnp.bfloat16)   # MXU operands are bf16; halves im2col HBM bytes

    # left 1: conv3x3(stride) + BN + ReLU -> bf16 intermediate
    p1, Ho, Wo = _im2col(x_bf, 3, stride, 1)
    w1 = jnp.transpose(params["w1"], (2, 3, 1, 0)).reshape(9 * Cin, Cout)
    y1 = _conv_bn(p1, w1, params["g1"], params["b1"], relu=True,
                  out_dtype=jnp.bfloat16)
    M = N * Ho * Wo

    # shortcut: identity, or conv1x1(stride) + BN -> bf16 intermediate
    if stride != 1 or Cin != Cout:
        ps, _, _ = _im2col(x_bf, 1, stride, 0)
        ws = jnp.transpose(params["ws"], (2, 3, 1, 0)).reshape(Cin, Cout)
        sc = _conv_bn(ps, ws, params["gs"], params["bs"], relu=False,
                      out_dtype=jnp.bfloat16)
    else:
        sc = x_bf.reshape(M, Cin)

    # left 2: conv3x3(1) + BN, then += shortcut, then ReLU (fused in the epilogue)
    # TODO(synk): lower the 3x3 convs as 9 shifted in-kernel matmuls over NHWC halo
    #             tiles and keep y1 -> conv2 on chip (removes the im2col expansion
    #             and this intermediate HBM round trip entirely).
    p2, _, _ = _im2col(y1.reshape(N, Ho, Wo, Cout), 3, 1, 1)
    w2 = jnp.transpose(params["w2"], (2, 3, 1, 0)).reshape(9 * Cout, Cout)
    out = _conv_bn(p2, w2, params["g2"], params["b2"], relu=True, residual=sc,
                   out_dtype=jnp.float32)

    return jnp.transpose(out.reshape(N, Ho, Wo, Cout), (0, 3, 1, 2))  # NHWC -> NCHW


# ----------------------------------------------------------------------------
# deterministic parameter init (matches module's __init__ shapes)
# ----------------------------------------------------------------------------
def init_params(key, cin, cout, stride):
    ks = jax.random.split(key, 9)
    p = {
        "w1": 0.1 * jax.random.normal(ks[0], (cout, cin, 3, 3), jnp.float32),
        "g1": 1.0 + 0.1 * jax.random.normal(ks[1], (1, cout), jnp.float32),
        "b1": 0.1 * jax.random.normal(ks[2], (1, cout), jnp.float32),
        "w2": 0.1 * jax.random.normal(ks[3], (cout, cout, 3, 3), jnp.float32),
        "g2": 1.0 + 0.1 * jax.random.normal(ks[4], (1, cout), jnp.float32),
        "b2": 0.1 * jax.random.normal(ks[5], (1, cout), jnp.float32),
    }
    if stride != 1 or cin != cout:
        p["ws"] = 0.1 * jax.random.normal(ks[6], (cout, cin, 1, 1), jnp.float32)
        p["gs"] = 1.0 + 0.1 * jax.random.normal(ks[7], (1, cout), jnp.float32)
        p["bs"] = 0.1 * jax.random.normal(ks[8], (1, cout), jnp.float32)
    return p


# ----------------------------------------------------------------------------
# pure-JAX reference (mirrors the PyTorch forward) for correctness checking
# ----------------------------------------------------------------------------
def _reference(x_nchw, params, stride):
    def conv(x, w, s, pad):
        return jax.lax.conv_general_dilated(
            x, w, (s, s), [(pad, pad), (pad, pad)],
            dimension_numbers=("NCHW", "OIHW", "NCHW"),
            precision=jax.lax.Precision.HIGHEST)

    def bn(y, g, b):
        mean = y.mean(axis=(0, 2, 3), keepdims=True)
        var = jnp.square(y - mean).mean(axis=(0, 2, 3), keepdims=True)
        return ((y - mean) * jax.lax.rsqrt(var + EPS)
                * g.reshape(1, -1, 1, 1) + b.reshape(1, -1, 1, 1))

    out = jnp.maximum(bn(conv(x_nchw, params["w1"], stride, 1),
                         params["g1"], params["b1"]), 0.0)
    out = bn(conv(out, params["w2"], 1, 1), params["g2"], params["b2"])
    if stride != 1 or x_nchw.shape[1] != params["w1"].shape[0]:
        sc = bn(conv(x_nchw, params["ws"], stride, 0), params["gs"], params["bs"])
    else:
        sc = x_nchw
    return jnp.maximum(out + sc, 0.0)


if __name__ == "__main__":
    key = jax.random.PRNGKey(0)
    kx1, kx2, kp1, kp2 = jax.random.split(key, 4)

    fwd = jax.jit(residual_block, static_argnums=2)

    # tolerance: bf16 MXU operands + bf16 intermediates vs f32 HIGHEST reference
    ATOL = RTOL = 4e-2

    # Case 1: downsampling block (stride=2, channel expansion -> 1x1 conv shortcut)
    x1 = jax.random.normal(kx1, (2, 4, 16, 16), jnp.float32)  # NCHW, like PyTorch
    params1 = init_params(kp1, 4, 8, 2)
    out1 = jax.block_until_ready(fwd(x1, params1, 2))
    ref1 = _reference(x1, params1, 2)
    assert out1.shape == (2, 8, 8, 8), out1.shape
    assert jnp.allclose(out1, ref1, atol=ATOL, rtol=RTOL), \
        float(jnp.max(jnp.abs(out1 - ref1)))

    # Case 2: identity shortcut (stride=1, same channels) -> multiple M tiles
    x2 = jax.random.normal(kx2, (2, 8, 16, 16), jnp.float32)
    params2 = init_params(kp2, 8, 8, 1)
    out2 = jax.block_until_ready(fwd(x2, params2, 1))
    ref2 = _reference(x2, params2, 1)
    assert out2.shape == (2, 8, 16, 16), out2.shape
    assert jnp.allclose(out2, ref2, atol=ATOL, rtol=RTOL), \
        float(jnp.max(jnp.abs(out2 - ref2)))

    print("KERNEL_OK")
</pallas_src>

<mosaic_0001>
module attributes {stable_mosaic.version = 11 : i64} {
  func.func @_matmul_stats_kernel_k1(%arg0: i32, %arg1: i32, %arg2: i32, %arg3: memref<128x128xbf16, #tpu.memory_space<vmem>>, %arg4: memref<128x128xbf16, #tpu.memory_space<vmem>>, %arg5: memref<128x128xbf16, #tpu.memory_space<vmem>>, %arg6: memref<8x128xf32, #tpu.memory_space<vmem>>) attributes {dimension_semantics = [#tpu.dimension_semantics<parallel>, #tpu.dimension_semantics<parallel>, #tpu.dimension_semantics<arbitrary>], iteration_bounds = array<i64: 1, 1, 1>, scalar_prefetch = 0 : i64, scratch_operands = 0 : i64, tpu.core_type = #tpu.core_type<tc>, window_params = [{transform_indices = @transform_0, window_bounds = array<i64: 128, 128>}, {transform_indices = @transform_1, window_bounds = array<i64: 128, 128>}, {transform_indices = @transform_2, window_bounds = array<i64: 128, 128>}, {transform_indices = @transform_3, window_bounds = array<i64: 8, 128>}]} {
    %c0 = arith.constant 0 : index
    %c0_0 = arith.constant 0 : index
    %0 = vector.load %arg3[%c0, %c0_0] : memref<128x128xbf16, #tpu.memory_space<vmem>>, vector<128x128xbf16>
    %c0_1 = arith.constant 0 : index
    %c0_2 = arith.constant 0 : index
    %1 = vector.load %arg4[%c0_1, %c0_2] : memref<128x128xbf16, #tpu.memory_space<vmem>>, vector<128x128xbf16>
    %cst = arith.constant dense<0.000000e+00> : vector<128x128xf32>
    %2 = tpu.matmul %0, %1, %cst {dimension_numbers = #tpu.dot_dimension_numbers<[1], [0], [0], [1], [0, 0, 1, 1], [], []>} : vector<128x128xbf16>, vector<128x128xbf16>, vector<128x128xf32> -> vector<128x128xf32>
    %3 = arith.truncf %2 : vector<128x128xf32> to vector<128x128xbf16>
    %c0_3 = arith.constant 0 : index
    %c0_4 = arith.constant 0 : index
    %4 = vector.load %arg5[%c0_3, %c0_4] : memref<128x128xbf16, #tpu.memory_space<vmem>>, vector<128x128xbf16>
    tpu.vector_store %arg5[%c0_3, %c0_4], %3 {strides = array<i32>} : memref<128x128xbf16, #tpu.memory_space<vmem>>, vector<128x128xbf16>,
    %cst_5 = arith.constant dense<0.000000e+00> : vector<128xf32>
    %5 = vector.multi_reduction <add>, %2, %cst_5 [0] : vector<128x128xf32> to vector<128xf32>
    %6 = vector.shape_cast %5 : vector<128xf32> to vector<1x128xf32>
    %c0_6 = arith.constant 0 : index
    %c0_7 = arith.constant 0 : index
    %7 = vector.load %arg6[%c0_6, %c0_7] : memref<8x128xf32, #tpu.memory_space<vmem>>, vector<1x128xf32>
    tpu.vector_store %arg6[%c0_6, %c0_7], %6 {strides = array<i32>} : memref<8x128xf32, #tpu.memory_space<vmem>>, vector<1x128xf32>,
    %8 = arith.mulf %2, %2 : vector<128x128xf32>
    %cst_8 = arith.constant dense<0.000000e+00> : vector<128xf32>
    %9 = vector.multi_reduction <add>, %8, %cst_8 [0] : vector<128x128xf32> to vector<128xf32>
    %10 = vector.shape_cast %9 : vector<128xf32> to vector<1x128xf32>
    %c1 = arith.constant 1 : index
    %c0_9 = arith.constant 0 : index
    %11 = vector.load %arg6[%c1, %c0_9] : memref<8x128xf32, #tpu.memory_space<vmem>>, vector<1x128xf32>
    tpu.vector_store %arg6[%c1, %c0_9], %10 {strides = array<i32>} : memref<8x128xf32, #tpu.memory_space<vmem>>, vector<1x128xf32>,
    return
  }
  func.func @transform_0(%arg0: i32, %arg1: i32, %arg2: i32) -> (i32, i32) {
    %c0_i32 = arith.constant 0 : i32
    return %arg0, %arg2 : i32, i32
  }
  func.func @transform_1(%arg0: i32, %arg1: i32, %arg2: i32) -> (i32, i32) {
    %c0_i32 = arith.constant 0 : i32
    return %arg2, %arg1 : i32, i32
  }
  func.func @transform_2(%arg0: i32, %arg1: i32, %arg2: i32) -> (i32, i32) {
    %c0_i32 = arith.constant 0 : i32
    return %arg0, %arg1 : i32, i32
  }
  func.func @transform_3(%arg0: i32, %arg1: i32, %arg2: i32) -> (i32, i32) {
    %c0_i32 = arith.constant 0 : i32
    return %arg0, %arg1 : i32, i32
  }
}

module attributes {stable_mosaic.version = 11 : i64} {
  func.func @_bn_apply_kernel(%arg0: i32, %arg1: memref<128x128xbf16, #tpu.memory_space<vmem>>, %arg2: memref<1x128xf32, #tpu.memory_space<vmem>>, %arg3: memref<1x128xf32, #tpu.memory_space<vmem>>, %arg4: memref<128x128xbf16, #tpu.memory_space<vmem>>) attributes {dimension_semantics = [#tpu.dimension_semantics<parallel>], iteration_bounds = array<i64: 1>, scalar_prefetch = 0 : i64, scratch_operands = 0 : i64, tpu.core_type = #tpu.core_type<tc>, window_params = [{transform_indices = @transform_0, window_bounds = array<i64: 128, 128>}, {pipeline_mode = #tpu.pipeline_mode<synchronous>, transform_indices = @transform_1, window_bounds = array<i64: 1, 128>}, {pipeline_mode = #tpu.pipeline_mode<synchronous>, transform_indices = @transform_2, window_bounds = array<i64: 1, 128>}, {transform_indices = @transform_3, window_bounds = array<i64: 128, 128>}]} {
    %c0 = arith.constant 0 : index
    %c0_0 = arith.constant 0 : index
    %0 = vector.load %arg1[%c0, %c0_0] : memref<128x128xbf16, #tpu.memory_space<vmem>>, vector<128x128xbf16>
    %1 = arith.extf %0 : vector<128x128xbf16> to vector<128x128xf32>
    %c0_1 = arith.constant 0 : index
    %c0_2 = arith.constant 0 : index
    %2 = vector.load %arg2[%c0_1, %c0_2] : memref<1x128xf32, #tpu.memory_space<vmem>>, vector<1x128xf32>
    %3 = vector.broadcast %2 : vector<1x128xf32> to vector<128x128xf32>
    %4 = arith.mulf %1, %3 : vector<128x128xf32>
    %c0_3 = arith.constant 0 : index
    %c0_4 = arith.constant 0 : index
    %5 = vector.load %arg3[%c0_3, %c0_4] : memref<1x128xf32, #tpu.memory_space<vmem>>, vector<1x128xf32>
    %6 = vector.broadcast %5 : vector<1x128xf32> to vector<128x128xf32>
    %7 = arith.addf %4, %6 : vector<128x128xf32>
    %cst = arith.constant 0.000000e+00 : f32
    %8 = vector.broadcast %cst : f32 to vector<128x128xf32>
    %9 = arith.maximumf %7, %8 : vector<128x128xf32>
    %10 = arith.truncf %9 : vector<128x128xf32> to vector<128x128xbf16>
    %c0_5 = arith.constant 0 : index
    %c0_6 = arith.constant 0 : index
    %11 = vector.load %arg4[%c0_5, %c0_6] : memref<128x128xbf16, #tpu.memory_space<vmem>>, vector<128x128xbf16>
    tpu.vector_store %arg4[%c0_5, %c0_6], %10 {strides = array<i32>} : memref<128x128xbf16, #tpu.memory_space<vmem>>, vector<128x128xbf16>,
    return
  }
  func.func @transform_0(%arg0: i32) -> (i32, i32) {
    %c0_i32 = arith.constant 0 : i32
    %c0_i32_0 = arith.constant 0 : i32
    return %arg0, %c0_i32 : i32, i32
  }
  func.func @transform_1(%arg0: i32) -> (i32, i32) {
    %c0_i32 = arith.constant 0 : i32
    %c0_i32_0 = arith.constant 0 : i32
    %c0_i32_1 = arith.constant 0 : i32
    return %c0_i32, %c0_i32_0 : i32, i32
  }
  func.func @transform_2(%arg0: i32) -> (i32, i32) {
    %c0_i32 = arith.constant 0 : i32
    %c0_i32_0 = arith.constant 0 : i32
    %c0_i32_1 = arith.constant 0 : i32
    return %c0_i32, %c0_i32_0 : i32, i32
  }
  func.func @transform_3(%arg0: i32) -> (i32, i32) {
    %c0_i32 = arith.constant 0 : i32
    %c0_i32_0 = arith.constant 0 : i32
    return %arg0, %c0_i32 : i32, i32
  }
}

module attributes {stable_mosaic.version = 11 : i64} {
  func.func @_bn_apply_kernel(%arg0: i32, %arg1: memref<128x128xbf16, #tpu.memory_space<vmem>>, %arg2: memref<1x128xf32, #tpu.memory_space<vmem>>, %arg3: memref<1x128xf32, #tpu.memory_space<vmem>>, %arg4: memref<128x128xbf16, #tpu.memory_space<vmem>>) attributes {dimension_semantics = [#tpu.dimension_semantics<parallel>], iteration_bounds = array<i64: 1>, scalar_prefetch = 0 : i64, scratch_operands = 0 : i64, tpu.core_type = #tpu.core_type<tc>, window_params = [{transform_indices = @transform_0, window_bounds = array<i64: 128, 128>}, {pipeline_mode = #tpu.pipeline_mode<synchronous>, transform_indices = @transform_1, window_bounds = array<i64: 1, 128>}, {pipeline_mode = #tpu.pipeline_mode<synchronous>, transform_indices = @transform_2, window_bounds = array<i64: 1, 128>}, {transform_indices = @transform_3, window_bounds = array<i64: 128, 128>}]} {
    %c0 = arith.constant 0 : index
    %c0_0 = arith.constant 0 : index
    %0 = vector.load %arg1[%c0, %c0_0] : memref<128x128xbf16, #tpu.memory_space<vmem>>, vector<128x128xbf16>
    %1 = arith.extf %0 : vector<128x128xbf16> to vector<128x128xf32>
    %c0_1 = arith.constant 0 : index
    %c0_2 = arith.constant 0 : index
    %2 = vector.load %arg2[%c0_1, %c0_2] : memref<1x128xf32, #tpu.memory_space<vmem>>, vector<1x128xf32>
    %3 = vector.broadcast %2 : vector<1x128xf32> to vector<128x128xf32>
    %4 = arith.mulf %1, %3 : vector<128x128xf32>
    %c0_3 = arith.constant 0 : index
    %c0_4 = arith.constant 0 : index
    %5 = vector.load %arg3[%c0_3, %c0_4] : memref<1x128xf32, #tpu.memory_space<vmem>>, vector<1x128xf32>
    %6 = vector.broadcast %5 : vector<1x128xf32> to vector<128x128xf32>
    %7 = arith.addf %4, %6 : vector<128x128xf32>
    %8 = arith.truncf %7 : vector<128x128xf32> to vector<128x128xbf16>
    %c0_5 = arith.constant 0 : index
    %c0_6 = arith.constant 0 : index
    %9 = vector.load %arg4[%c0_5, %c0_6] : memref<128x128xbf16, #tpu.memory_space<vmem>>, vector<128x128xbf16>
    tpu.vector_store %arg4[%c0_5, %c0_6], %8 {strides = array<i32>} : memref<128x128xbf16, #tpu.memory_space<vmem>>, vector<128x128xbf16>,
    return
  }
  func.func @transform_0(%arg0: i32) -> (i32, i32) {
    %c0_i32 = arith.constant 0 : i32
    %c0_i32_0 = arith.constant 0 : i32
    return %arg0, %c0_i32 : i32, i32
  }
  func.func @transform_1(%arg0: i32) -> (i32, i32) {
    %c0_i32 = arith.constant 0 : i32
    %c0_i32_0 = arith.constant 0 : i32
    %c0_i32_1 = arith.constant 0 : i32
    return %c0_i32, %c0_i32_0 : i32, i32
  }
  func.func @transform_2(%arg0: i32) -> (i32, i32) {
    %c0_i32 = arith.constant 0 : i32
    %c0_i32_0 = arith.constant 0 : i32
    %c0_i32_1 = arith.constant 0 : i32
    return %c0_i32, %c0_i32_0 : i32, i32
  }
  func.func @transform_3(%arg0: i32) -> (i32, i32) {
    %c0_i32 = arith.constant 0 : i32
    %c0_i32_0 = arith.constant 0 : i32
    return %arg0, %c0_i32 : i32, i32
  }
}

module attributes {stable_mosaic.version = 11 : i64} {
  func.func @_bn_res_apply_kernel(%arg0: i32, %arg1: memref<128x128xbf16, #tpu.memory_space<vmem>>, %arg2: memref<1x128xf32, #tpu.memory_space<vmem>>, %arg3: memref<1x128xf32, #tpu.memory_space<vmem>>, %arg4: memref<128x128xbf16, #tpu.memory_space<vmem>>, %arg5: memref<128x128xf32, #tpu.memory_space<vmem>>) attributes {dimension_semantics = [#tpu.dimension_semantics<parallel>], iteration_bounds = array<i64: 1>, scalar_prefetch = 0 : i64, scratch_operands = 0 : i64, tpu.core_type = #tpu.core_type<tc>, window_params = [{transform_indices = @transform_0, window_bounds = array<i64: 128, 128>}, {pipeline_mode = #tpu.pipeline_mode<synchronous>, transform_indices = @transform_1, window_bounds = array<i64: 1, 128>}, {pipeline_mode = #tpu.pipeline_mode<synchronous>, transform_indices = @transform_2, window_bounds = array<i64: 1, 128>}, {transform_indices = @transform_3, window_bounds = array<i64: 128, 128>}, {transform_indices = @transform_4, window_bounds = array<i64: 128, 128>}]} {
    %c0 = arith.constant 0 : index
    %c0_0 = arith.constant 0 : index
    %0 = vector.load %arg1[%c0, %c0_0] : memref<128x128xbf16, #tpu.memory_space<vmem>>, vector<128x128xbf16>
    %1 = arith.extf %0 : vector<128x128xbf16> to vector<128x128xf32>
    %c0_1 = arith.constant 0 : index
    %c0_2 = arith.constant 0 : index
    %2 = vector.load %arg2[%c0_1, %c0_2] : memref<1x128xf32, #tpu.memory_space<vmem>>, vector<1x128xf32>
    %3 = vector.broadcast %2 : vector<1x128xf32> to vector<128x128xf32>
    %4 = arith.mulf %1, %3 : vector<128x128xf32>
    %c0_3 = arith.constant 0 : index
    %c0_4 = arith.constant 0 : index
    %5 = vector.load %arg3[%c0_3, %c0_4] : memref<1x128xf32, #tpu.memory_space<vmem>>, vector<1x128xf32>
    %6 = vector.broadcast %5 : vector<1x128xf32> to vector<128x128xf32>
    %7 = arith.addf %4, %6 : vector<128x128xf32>
    %c0_5 = arith.constant 0 : index
    %c0_6 = arith.constant 0 : index
    %8 = vector.load %arg4[%c0_5, %c0_6] : memref<128x128xbf16, #tpu.memory_space<vmem>>, vector<128x128xbf16>
    %9 = arith.extf %8 : vector<128x128xbf16> to vector<128x128xf32>
    %10 = arith.addf %7, %9 : vector<128x128xf32>
    %cst = arith.constant 0.000000e+00 : f32
    %11 = vector.broadcast %cst : f32 to vector<128x128xf32>
    %12 = arith.maximumf %10, %11 : vector<128x128xf32>
    %c0_7 = arith.constant 0 : index
    %c0_8 = arith.constant 0 : index
    %13 = vector.load %arg5[%c0_7, %c0_8] : memref<128x128xf32, #tpu.memory_space<vmem>>, vector<128x128xf32>
    tpu.vector_store %arg5[%c0_7, %c0_8], %12 {strides = array<i32>} : memref<128x128xf32, #tpu.memory_space<vmem>>, vector<128x128xf32>,
    return
  }
  func.func @transform_0(%arg0: i32) -> (i32, i32) {
    %c0_i32 = arith.constant 0 : i32
    %c0_i32_0 = arith.constant 0 : i32
    return %arg0, %c0_i32 : i32, i32
  }
  func.func @transform_1(%arg0: i32) -> (i32, i32) {
    %c0_i32 = arith.constant 0 : i32
    %c0_i32_0 = arith.constant 0 : i32
    %c0_i32_1 = arith.constant 0 : i32
    return %c0_i32, %c0_i32_0 : i32, i32
  }
  func.func @transform_2(%arg0: i32) -> (i32, i32) {
    %c0_i32 = arith.constant 0 : i32
    %c0_i32_0 = arith.constant 0 : i32
    %c0_i32_1 = arith.constant 0 : i32
    return %c0_i32, %c0_i32_0 : i32, i32
  }
  func.func @transform_3(%arg0: i32) -> (i32, i32) {
    %c0_i32 = arith.constant 0 : i32
    %c0_i32_0 = arith.constant 0 : i32
    return %arg0, %c0_i32 : i32, i32
  }
  func.func @transform_4(%arg0: i32) -> (i32, i32) {
    %c0_i32 = arith.constant 0 : i32
    %c0_i32_0 = arith.constant 0 : i32
    return %arg0, %c0_i32 : i32, i32
  }
}

</mosaic_0001>

<llo_original>
// kernel: residual_block.7
$region0: #{residual_block.7}
  #allocation0 [shape = 'u32[]', space=smem, size = 0x4, offset = 0x4, fixed_abs, tag = 'smem constant byte address 0x4 - core index']
  #allocation1 [shape = 'u32[144,128]{1,0:T(1,128)}', space=vmem, size = 0x12000, scoped, tag = 'internal scratch']
  %s0 = inlined_call_operand.vmem [shape: bf16[128,128], index: 0, kind: input, shape index: {}]
  %s1 = inlined_call_operand.vmem [shape: f32[1,128], index: 1, kind: input, shape index: {}]
  %s2 = inlined_call_operand.vmem [shape: f32[1,128], index: 2, kind: input, shape index: {}]
  %s3 = inlined_call_operand.vmem [shape: bf16[128,128], index: 3, kind: output, shape index: {}]
  %s4 = sld [smem:[#allocation0]]
  $region22: #{residual_block.7} parent=0
    _
  %s6 = ssub.s32 1, %s4
  %s7 = scalar_select 0, %s6, %s4
  // Predicated region
  $region2: #{residual_block.7} parent=0 // pred_check
    _
  $region3: #{residual_block.7} parent=0 // pred_check_branch
    %9 = sbr.rel (0) target = $region5
  $region4: #{residual_block.7} parent=0 // pred_region
    _
  $region5: #{residual_block.7} parent=0 // pred_fallthru
    _
  // Predicated region
  $region6: #{residual_block.7} parent=0 // pred_check
    _
  $region7: #{residual_block.7} parent=0 // pred_check_branch
    %11 = sbr.rel (0) target = $region9
  $region8: #{residual_block.7} parent=0 // pred_region
    _
  $region9: #{residual_block.7} parent=0 // pred_fallthru
    _
  // Predicated region
  $region10: #{residual_block.7} parent=0 // pred_check
    _
  $region11: #{residual_block.7} parent=0 // pred_check_branch
    %13 = sbr.rel (0) target = $region13
  $region12: #{residual_block.7} parent=0 // pred_region
    _
  $region13: #{residual_block.7} parent=0 // pred_fallthru
    _
  %v14 = vld [vmem:[%s0] sm:$0xf]
  %v15 = vld [vmem:[%s0 + $0x4] sm:$0xf]
  %v16 = vld [vmem:[%s0 + $0x8] sm:$0xf]
  %v17 = vld [vmem:[%s0 + $0xc] sm:$0xf]
  %v18 = vld [vmem:[%s0 + $0x10] sm:$0xf]
  %v19 = vld [vmem:[%s0 + $0x14] sm:$0xf]
  %v20 = vld [vmem:[%s0 + $0x18] sm:$0xf]
  %v21 = vld [vmem:[%s0 + $0x1c] sm:$0xf]
  %v22 = vld [vmem:[%s0 + $0x20] sm:$0xf]
  %v23 = vld [vmem:[%s0 + $0x24] sm:$0xf]
  %v24 = vld [vmem:[%s0 + $0x28] sm:$0xf]
  %v25 = vld [vmem:[%s0 + $0x2c] sm:$0xf]
  %v26 = vld [vmem:[%s0 + $0x30] sm:$0xf]
  %v27 = vld [vmem:[%s0 + $0x34] sm:$0xf]
  %v28 = vld [vmem:[%s0 + $0x38] sm:$0xf]
  %v29 = vld [vmem:[%s0 + $0x3c] sm:$0xf]
  %v30 = vunpack.c.l.bf16 %v14
  %v31 = vunpack.c.l.bf16 %v15
  %v32 = vunpack.c.l.bf16 %v16
  %v33 = vunpack.c.l.bf16 %v17
  %v34 = vunpack.c.l.bf16 %v18
  %v35 = vunpack.c.l.bf16 %v19
  %v36 = vunpack.c.l.bf16 %v20
  %v37 = vunpack.c.l.bf16 %v21
  %v38 = vunpack.c.l.bf16 %v22
  %v39 = vunpack.c.l.bf16 %v23
  %v40 = vunpack.c.l.bf16 %v24
  %v41 = vunpack.c.l.bf16 %v25
  %v42 = vunpack.c.l.bf16 %v26
  %v43 = vunpack.c.l.bf16 %v27
  %v44 = vunpack.c.l.bf16 %v28
  %v45 = vunpack.c.l.bf16 %v29
  %v46 = vld [vmem:[%s1] sm:$0x1]
  %v48 = vlaneseq
  %v49 = vshrl.u32 %v48, 7
  %v50 = vsub.s32 0, %v49
  %v51 = vrot.slane %v46, %v50
  %v53 = vmul.f32 %v30, %v51
  %v54 = vmul.f32 %v31, %v51
  %v55 = vmul.f32 %v32, %v51
  %v56 = vmul.f32 %v33, %v51
  %v57 = vmul.f32 %v34, %v51
  %v58 = vmul.f32 %v35, %v51
  %v59 = vmul.f32 %v36, %v51
  %v60 = vmul.f32 %v37, %v51
  %v61 = vmul.f32 %v38, %v51
  %v62 = vmul.f32 %v39, %v51
  %v63 = vmul.f32 %v40, %v51
  %v64 = vmul.f32 %v41, %v51
  %v65 = vmul.f32 %v42, %v51
  %v66 = vmul.f32 %v43, %v51
  %v67 = vmul.f32 %v44, %v51
  %v68 = vmul.f32 %v45, %v51
  %v69 = vld [vmem:[%s2] sm:$0x1]
  %v71 = vlaneseq
  %v72 = vshrl.u32 %v71, 7
  %v73 = vsub.s32 0, %v72
  %v74 = vrot.slane %v69, %v73
  %v76 = vadd.f32 %v53, %v74
  %v77 = vadd.f32 %v54, %v74
  %v78 = vadd.f32 %v55, %v74
  %v79 = vadd.f32 %v56, %v74
  %v80 = vadd.f32 %v57, %v74
  %v81 = vadd.f32 %v58, %v74
  %v82 = vadd.f32 %v59, %v74
  %v83 = vadd.f32 %v60, %v74
  %v84 = vadd.f32 %v61, %v74
  %v85 = vadd.f32 %v62, %v74
  %v86 = vadd.f32 %v63, %v74
  %v87 = vadd.f32 %v64, %v74
  %v88 = vadd.f32 %v65, %v74
  %v89 = vadd.f32 %v66, %v74
  %v90 = vadd.f32 %v67, %v74
  %v91 = vadd.f32 %v68, %v74
  %v92 = vmax.f32 %v76, 0.0
  %v93 = vmax.f32 %v77, 0.0
  %v94 = vmax.f32 %v78, 0.0
  %v95 = vmax.f32 %v79, 0.0
  %v96 = vmax.f32 %v80, 0.0
  %v97 = vmax.f32 %v81, 0.0
  %v98 = vmax.f32 %v82, 0.0
  %v99 = vmax.f32 %v83, 0.0
  %v100 = vmax.f32 %v84, 0.0
  %v101 = vmax.f32 %v85, 0.0
  %v102 = vmax.f32 %v86, 0.0
  %v103 = vmax.f32 %v87, 0.0
  %v104 = vmax.f32 %v88, 0.0
  %v105 = vmax.f32 %v89, 0.0
  %v106 = vmax.f32 %v90, 0.0
  %v107 = vmax.f32 %v91, 0.0
  %v108 = vpack.c.bf16 %v93, %v92
  %v109 = vpack.c.bf16 %v95, %v94
  %v110 = vpack.c.bf16 %v97, %v96
  %v111 = vpack.c.bf16 %v99, %v98
  %v112 = vpack.c.bf16 %v101, %v100
  %v113 = vpack.c.bf16 %v103, %v102
  %v114 = vpack.c.bf16 %v105, %v104
  %v115 = vpack.c.bf16 %v107, %v106
  %v124 = vunpack.c.l.b16 %v108
  %v125 = vunpack.c.h.b16 %v108
  %v126 = vunpack.c.l.b16 %v109
  %v127 = vunpack.c.h.b16 %v109
  %v128 = vunpack.c.l.b16 %v110
  %v129 = vunpack.c.h.b16 %v110
  %v130 = vunpack.c.l.b16 %v111
  %v131 = vunpack.c.h.b16 %v111
  %v132 = vunpack.c.l.b16 %v112
  %v133 = vunpack.c.h.b16 %v112
  %v134 = vunpack.c.l.b16 %v113
  %v135 = vunpack.c.h.b16 %v113
  %v136 = vunpack.c.l.b16 %v114
  %v137 = vunpack.c.h.b16 %v114
  %v138 = vunpack.c.l.b16 %v115
  %v139 = vunpack.c.h.b16 %v115
  %v140 = vpack.c.b16 %v124, %v124
  %v141 = vpack.c.b16 %v125, %v125
  %v142 = vpack.c.b16 %v126, %v126
  %v143 = vpack.c.b16 %v127, %v127
  %v144 = vpack.c.b16 %v128, %v128
  %v145 = vpack.c.b16 %v129, %v129
  %v146 = vpack.c.b16 %v130, %v130
  %v147 = vpack.c.b16 %v131, %v131
  %v148 = vpack.c.b16 %v132, %v132
  %v149 = vpack.c.b16 %v133, %v133
  %v150 = vpack.c.b16 %v134, %v134
  %v151 = vpack.c.b16 %v135, %v135
  %v152 = vpack.c.b16 %v136, %v136
  %v153 = vpack.c.b16 %v137, %v137
  %v154 = vpack.c.b16 %v138, %v138
  %v155 = vpack.c.b16 %v139, %v139
  %172 = vst [vmem:[%s3] sm:$0xf] %v140
  %173 = vst [vmem:[%s3 + $0x4] sm:$0xf] %v141
  %174 = vst [vmem:[%s3 + $0x8] sm:$0xf] %v142
  %175 = vst [vmem:[%s3 + $0xc] sm:$0xf] %v143
  %176 = vst [vmem:[%s3 + $0x10] sm:$0xf] %v144
  %177 = vst [vmem:[%s3 + $0x14] sm:$0xf] %v145
  %178 = vst [vmem:[%s3 + $0x18] sm:$0xf] %v146
  %179 = vst [vmem:[%s3 + $0x1c] sm:$0xf] %v147
  %180 = vst [vmem:[%s3 + $0x20] sm:$0xf] %v148
  %181 = vst [vmem:[%s3 + $0x24] sm:$0xf] %v149
  %182 = vst [vmem:[%s3 + $0x28] sm:$0xf] %v150
  %183 = vst [vmem:[%s3 + $0x2c] sm:$0xf] %v151
  %184 = vst [vmem:[%s3 + $0x30] sm:$0xf] %v152
  %185 = vst [vmem:[%s3 + $0x34] sm:$0xf] %v153
  %186 = vst [vmem:[%s3 + $0x38] sm:$0xf] %v154
  %187 = vst [vmem:[%s3 + $0x3c] sm:$0xf] %v155
  // Predicated region
  $region14: #{residual_block.7} parent=0 // pred_check
    _
  $region15: #{residual_block.7} parent=0 // pred_check_branch
    %189 = sbr.rel (0) target = $region17
  $region16: #{residual_block.7} parent=0 // pred_region
    _
  $region17: #{residual_block.7} parent=0 // pred_fallthru
    _
  // Predicated region
  $region18: #{residual_block.7} parent=0 // pred_check
    _
  $region19: #{residual_block.7} parent=0 // pred_check_branch
    %191 = sbr.rel (0) target = $region21
  $region20: #{residual_block.7} parent=0 // pred_region
    _
  $region21: #{residual_block.7} parent=0 // pred_fallthru
    _

// kernel: residual_block.6
$region0: #{residual_block.6}
  #allocation0 [shape = 'u32[]', space=smem, size = 0x4, offset = 0x4, fixed_abs, tag = 'smem constant byte address 0x4 - core index']
  #allocation1 [shape = 'u32[144,128]{1,0:T(1,128)}', space=vmem, size = 0x12000, scoped, tag = 'internal scratch']
  %s0 = inlined_call_operand.vmem [shape: bf16[128,128], index: 0, kind: input, shape index: {}]
  %s1 = inlined_call_operand.vmem [shape: bf16[128,128], index: 1, kind: input, shape index: {}]
  %s2 = inlined_call_operand.vmem [shape: bf16[128,128], index: 2, kind: output, shape index: {0}]
  %s3 = inlined_call_operand.vmem [shape: f32[8,128], index: 3, kind: output, shape index: {1}]
  %4 = xla_tuple %s2, %s3
  %s5 = sld [smem:[#allocation0]]
  $region26: #{residual_block.6} parent=0
    _
  %s7 = ssub.s32 1, %s5
  %s8 = scalar_select 0, %s7, %s5
  // Predicated region
  $region2: #{residual_block.6} parent=0 // pred_check
    _
  $region3: #{residual_block.6} parent=0 // pred_check_branch
    %10 = sbr.rel (0) target = $region5
  $region4: #{residual_block.6} parent=0 // pred_region
    _
  $region5: #{residual_block.6} parent=0 // pred_fallthru
    _
  // Predicated region
  $region6: #{residual_block.6} parent=0 // pred_check
    _
  $region7: #{residual_block.6} parent=0 // pred_check_branch
    %12 = sbr.rel (0) target = $region9
  $region8: #{residual_block.6} parent=0 // pred_region
    _
  $region9: #{residual_block.6} parent=0 // pred_fallthru
    _
  %v14 = vld [vmem:[%s0] sm:$0xf]
  %v15 = vld [vmem:[%s0 + $0x4] sm:$0xf]
  %v16 = vld [vmem:[%s0 + $0x8] sm:$0xf]
  %v17 = vld [vmem:[%s0 + $0xc] sm:$0xf]
  %v18 = vld [vmem:[%s0 + $0x10] sm:$0xf]
  %v19 = vld [vmem:[%s0 + $0x14] sm:$0xf]
  %v20 = vld [vmem:[%s0 + $0x18] sm:$0xf]
  %v21 = vld [vmem:[%s0 + $0x1c] sm:$0xf]
  %v22 = vld [vmem:[%s0 + $0x20] sm:$0xf]
  %v23 = vld [vmem:[%s0 + $0x24] sm:$0xf]
  %v24 = vld [vmem:[%s0 + $0x28] sm:$0xf]
  %v25 = vld [vmem:[%s0 + $0x2c] sm:$0xf]
  %v26 = vld [vmem:[%s0 + $0x30] sm:$0xf]
  %v27 = vld [vmem:[%s0 + $0x34] sm:$0xf]
  %v28 = vld [vmem:[%s0 + $0x38] sm:$0xf]
  %v29 = vld [vmem:[%s0 + $0x3c] sm:$0xf]
  %v30 = vld [vmem:[%s1] sm:$0xf]
  %v31 = vld [vmem:[%s1 + $0x4] sm:$0xf]
  %v32 = vld [vmem:[%s1 + $0x8] sm:$0xf]
  %v33 = vld [vmem:[%s1 + $0xc] sm:$0xf]
  %v34 = vld [vmem:[%s1 + $0x10] sm:$0xf]
  %v35 = vld [vmem:[%s1 + $0x14] sm:$0xf]
  %v36 = vld [vmem:[%s1 + $0x18] sm:$0xf]
  %v37 = vld [vmem:[%s1 + $0x1c] sm:$0xf]
  %v38 = vld [vmem:[%s1 + $0x20] sm:$0xf]
  %v39 = vld [vmem:[%s1 + $0x24] sm:$0xf]
  %v40 = vld [vmem:[%s1 + $0x28] sm:$0xf]
  %v41 = vld [vmem:[%s1 + $0x2c] sm:$0xf]
  %v42 = vld [vmem:[%s1 + $0x30] sm:$0xf]
  %v43 = vld [vmem:[%s1 + $0x34] sm:$0xf]
  %v44 = vld [vmem:[%s1 + $0x38] sm:$0xf]
  %v45 = vld [vmem:[%s1 + $0x3c] sm:$0xf]
  %v62 = vunpack.c.l.b16 %v14
  %v63 = vunpack.c.l.b16 %v15
  %v64 = vunpack.c.l.b16 %v16
  %v65 = vunpack.c.l.b16 %v17
  %v66 = vunpack.c.l.b16 %v18
  %v67 = vunpack.c.l.b16 %v19
  %v68 = vunpack.c.l.b16 %v20
  %v69 = vunpack.c.l.b16 %v21
  %v70 = vunpack.c.l.b16 %v22
  %v71 = vunpack.c.l.b16 %v23
  %v72 = vunpack.c.l.b16 %v24
  %v73 = vunpack.c.l.b16 %v25
  %v74 = vunpack.c.l.b16 %v26
  %v75 = vunpack.c.l.b16 %v27
  %v76 = vunpack.c.l.b16 %v28
  %v77 = vunpack.c.l.b16 %v29
  %v78 = vpack.c.b16 %v63, %v62
  %v79 = vpack.c.b16 %v65, %v64
  %v80 = vpack.c.b16 %v67, %v66
  %v81 = vpack.c.b16 %v69, %v68
  %v82 = vpack.c.b16 %v71, %v70
  %v83 = vpack.c.b16 %v73, %v72
  %v84 = vpack.c.b16 %v75, %v74
  %v85 = vpack.c.b16 %v77, %v76
  %v110 = vunpack.c.l.b16 %v30
  %v111 = vunpack.c.l.b16 %v31
  %v112 = vunpack.c.l.b16 %v32
  %v113 = vunpack.c.l.b16 %v33
  %v114 = vunpack.c.l.b16 %v34
  %v115 = vunpack.c.l.b16 %v35
  %v116 = vunpack.c.l.b16 %v36
  %v117 = vunpack.c.l.b16 %v37
  %v118 = vunpack.c.l.b16 %v38
  %v119 = vunpack.c.l.b16 %v39
  %v120 = vunpack.c.l.b16 %v40
  %v121 = vunpack.c.l.b16 %v41
  %v122 = vunpack.c.l.b16 %v42
  %v123 = vunpack.c.l.b16 %v43
  %v124 = vunpack.c.l.b16 %v44
  %v125 = vunpack.c.l.b16 %v45
  %v126 = vpack.c.b16 %v111, %v110
  %v127 = vpack.c.b16 %v113, %v112
  %v128 = vpack.c.b16 %v115, %v114
  %v129 = vpack.c.b16 %v117, %v116
  %v130 = vpack.c.b16 %v119, %v118
  %v131 = vpack.c.b16 %v121, %v120
  %v132 = vpack.c.b16 %v123, %v122
  %v133 = vpack.c.b16 %v125, %v124
  %142 = vmatprep.subr.bf16.mxu0 0
  %143 = vmatpush1.bf16.msra.mxu0 %v126
  %144 = vmatprep.subr.bf16.mxu0 0
  %145 = vmatpush1.bf16.msra.mxu0 %v127
  %146 = vmatprep.subr.bf16.mxu0 0
  %147 = vmatpush1.bf16.msra.mxu0 %v128
  %148 = vmatprep.subr.bf16.mxu0 0
  %149 = vmatpush1.bf16.msra.mxu0 %v129
  %150 = vmatprep.subr.bf16.mxu0 0
  %151 = vmatpush1.bf16.msra.mxu0 %v130
  %152 = vmatprep.subr.bf16.mxu0 0
  %153 = vmatpush1.bf16.msra.mxu0 %v131
  %154 = vmatprep.subr.bf16.mxu0 0
  %155 = vmatpush1.bf16.msra.mxu0 %v132
  %156 = vmatprep.subr.bf16.mxu0 0
  %157 = vmatpush1.bf16.msra.mxu0 %v133
  %158 = vmatprep.subr.bf16.mxu0 0
  %159 = vmatpush1.bf16.msra.mxu0 0
  %160 = vmatprep.subr.bf16.mxu0 0
  %161 = vmatpush1.bf16.msra.mxu0 0
  %162 = vmatprep.subr.bf16.mxu0 0
  %163 = vmatpush1.bf16.msra.mxu0 0
  %164 = vmatprep.subr.bf16.mxu0 0
  %165 = vmatpush1.bf16.msra.mxu0 0
  %166 = vmatprep.subr.bf16.mxu0 0
  %167 = vmatpush1.bf16.msra.mxu0 0
  %168 = vmatprep.subr.bf16.mxu0 0
  %169 = vmatpush1.bf16.msra.mxu0 0
  %170 = vmatprep.subr.bf16.mxu0 0
  %171 = vmatpush1.bf16.msra.mxu0 0
  %172 = vmatprep.subr.bf16.mxu0 0
  %173 = vmatpush1.bf16.msra.mxu0 0
  %174 = vmatprep.mubr.bf16.mxu0 0
  %175 = vmatmul.mubr.bf16.gmra.mrb[0].mxu0 %v78
  %v176 = vpop.f32.mrb[0].mxu0
  %v177 = vadd.f32 0.0, %v176
  %v178 = vpop.f32.mrb[0].mxu0
  %v179 = vpop.f32.mrb[0].mxu0
  %v180 = vadd.f32 0.0, %v179
  %v181 = vpop.f32.mrb[0].mxu0
  %182 = vmatprep.mubr.bf16.mxu0 0
  %183 = vmatmul.mubr.bf16.gmra.mrb[0].mxu0 %v79
  %v184 = vpop.f32.mrb[0].mxu0
  %v185 = vadd.f32 0.0, %v184
  %v186 = vpop.f32.mrb[0].mxu0
  %v187 = vpop.f32.mrb[0].mxu0
  %v188 = vadd.f32 0.0, %v187
  %v189 = vpop.f32.mrb[0].mxu0
  %190 = vmatprep.mubr.bf16.mxu0 0
  %191 = vmatmul.mubr.bf16.gmra.mrb[0].mxu0 %v80
  %v192 = vpop.f32.mrb[0].mxu0
  %v193 = vadd.f32 0.0, %v192
  %v194 = vpop.f32.mrb[0].mxu0
  %v195 = vpop.f32.mrb[0].mxu0
  %v196 = vadd.f32 0.0, %v195
  %v197 = vpop.f32.mrb[0].mxu0
  %198 = vmatprep.mubr.bf16.mxu0 0
  %199 = vmatmul.mubr.bf16.gmra.mrb[0].mxu0 %v81
  %v200 = vpop.f32.mrb[0].mxu0
  %v201 = vadd.f32 0.0, %v200
  %v202 = vpop.f32.mrb[0].mxu0
  %v203 = vpop.f32.mrb[0].mxu0
  %v204 = vadd.f32 0.0, %v203
  %v205 = vpop.f32.mrb[0].mxu0
  %206 = vmatprep.mubr.bf16.mxu0 0
  %207 = vmatmul.mubr.bf16.gmra.mrb[0].mxu0 %v82
  %v208 = vpop.f32.mrb[0].mxu0
  %v209 = vadd.f32 0.0, %v208
  %v210 = vpop.f32.mrb[0].mxu0
  %v211 = vpop.f32.mrb[0].mxu0
  %v212 = vadd.f32 0.0, %v211
  %v213 = vpop.f32.mrb[0].mxu0
  %214 = vmatprep.mubr.bf16.mxu0 0
  %215 = vmatmul.mubr.bf16.gmra.mrb[0].mxu0 %v83
  %v216 = vpop.f32.mrb[0].mxu0
  %v217 = vadd.f32 0.0, %v216
  %v218 = vpop.f32.mrb[0].mxu0
  %v219 = vpop.f32.mrb[0].mxu0
  %v220 = vadd.f32 0.0, %v219
  %v221 = vpop.f32.mrb[0].mxu0
  %222 = vmatprep.mubr.bf16.mxu0 0
  %223 = vmatmul.mubr.bf16.gmra.mrb[0].mxu0 %v84
  %v224 = vpop.f32.mrb[0].mxu0
  %v225 = vadd.f32 0.0, %v224
  %v226 = vpop.f32.mrb[0].mxu0
  %v227 = vpop.f32.mrb[0].mxu0
  %v228 = vadd.f32 0.0, %v227
  %v229 = vpop.f32.mrb[0].mxu0
  %230 = vmatprep.mubr.bf16.mxu0 0
  %231 = vmatmul.mubr.bf16.gmra.mrb[0].mxu0 %v85
  %v232 = vpop.f32.mrb[0].mxu0
  %v233 = vadd.f32 0.0, %v232
  %v234 = vpop.f32.mrb[0].mxu0
  %v235 = vpop.f32.mrb[0].mxu0
  %v236 = vadd.f32 0.0, %v235
  %v237 = vpop.f32.mrb[0].mxu0
  %238 = vdwg.mxu0
  %v239 = vpack.c.bf16 %v180, %v177
  %v240 = vpack.c.bf16 %v188, %v185
  %v241 = vpack.c.bf16 %v196, %v193
  %v242 = vpack.c.bf16 %v204, %v201
  %v243 = vpack.c.bf16 %v212, %v209
  %v244 = vpack.c.bf16 %v220, %v217
  %v245 = vpack.c.bf16 %v228, %v225
  %v246 = vpack.c.bf16 %v236, %v233
  %v255 = vunpack.c.l.b16 %v239
  %v256 = vunpack.c.h.b16 %v239
  %v257 = vunpack.c.l.b16 %v240
  %v258 = vunpack.c.h.b16 %v240
  %v259 = vunpack.c.l.b16 %v241
  %v260 = vunpack.c.h.b16 %v241
  %v261 = vunpack.c.l.b16 %v242
  %v262 = vunpack.c.h.b16 %v242
  %v263 = vunpack.c.l.b16 %v243
  %v264 = vunpack.c.h.b16 %v243
  %v265 = vunpack.c.l.b16 %v244
  %v266 = vunpack.c.h.b16 %v244
  %v267 = vunpack.c.l.b16 %v245
  %v268 = vunpack.c.h.b16 %v245
  %v269 = vunpack.c.l.b16 %v246
  %v270 = vunpack.c.h.b16 %v246
  %v271 = vpack.c.b16 %v255, %v255
  %v272 = vpack.c.b16 %v256, %v256
  %v273 = vpack.c.b16 %v257, %v257
  %v274 = vpack.c.b16 %v258, %v258
  %v275 = vpack.c.b16 %v259, %v259
  %v276 = vpack.c.b16 %v260, %v260
  %v277 = vpack.c.b16 %v261, %v261
  %v278 = vpack.c.b16 %v262, %v262
  %v279 = vpack.c.b16 %v263, %v263
  %v280 = vpack.c.b16 %v264, %v264
  %v281 = vpack.c.b16 %v265, %v265
  %v282 = vpack.c.b16 %v266, %v266
  %v283 = vpack.c.b16 %v267, %v267
  %v284 = vpack.c.b16 %v268, %v268
  %v285 = vpack.c.b16 %v269, %v269
  %v286 = vpack.c.b16 %v270, %v270
  %303 = vst [vmem:[%s2] sm:$0xf] %v271
  %304 = vst [vmem:[%s2 + $0x4] sm:$0xf] %v272
  %305 = vst [vmem:[%s2 + $0x8] sm:$0xf] %v273
  %306 = vst [vmem:[%s2 + $0xc] sm:$0xf] %v274
  %307 = vst [vmem:[%s2 + $0x10] sm:$0xf] %v275
  %308 = vst [vmem:[%s2 + $0x14] sm:$0xf] %v276
  %309 = vst [vmem:[%s2 + $0x18] sm:$0xf] %v277
  %310 = vst [vmem:[%s2 + $0x1c] sm:$0xf] %v278
  %311 = vst [vmem:[%s2 + $0x20] sm:$0xf] %v279
  %312 = vst [vmem:[%s2 + $0x24] sm:$0xf] %v280
  %313 = vst [vmem:[%s2 + $0x28] sm:$0xf] %v281
  %314 = vst [vmem:[%s2 + $0x2c] sm:$0xf] %v282
  %315 = vst [vmem:[%s2 + $0x30] sm:$0xf] %v283
  %316 = vst [vmem:[%s2 + $0x34] sm:$0xf] %v284
  %317 = vst [vmem:[%s2 + $0x38] sm:$0xf] %v285
  %318 = vst [vmem:[%s2 + $0x3c] sm:$0xf] %v286
  %v319 = vadd.f32 %v177, %v180
  %v320 = vadd.f32 %v319, %v185
  %v321 = vadd.f32 %v320, %v188
  %v322 = vadd.f32 %v321, %v193
  %v323 = vadd.f32 %v322, %v196
  %v324 = vadd.f32 %v323, %v201
  %v325 = vadd.f32 %v324, %v204
  %v326 = vadd.f32 %v325, %v209
  %v327 = vadd.f32 %v326, %v212
  %v328 = vadd.f32 %v327, %v217
  %v329 = vadd.f32 %v328, %v220
  %v330 = vadd.f32 %v329, %v225
  %v331 = vadd.f32 %v330, %v228
  %v332 = vadd.f32 %v331, %v233
  %v333 = vadd.f32 %v332, %v236
  %v334 = vrot.slane %v333, 4
  %v335 = vadd.f32 %v333, %v334
  %v336 = vrot.slane %v335, 2
  %v337 = vadd.f32 %v335, %v336
  %v338 = vrot.slane %v337, 1
  %v339 = vadd.f32 %v337, %v338
  %340 = vst [vmem:[%s3] sm:$0x1] %v339
  %v341 = vmul.f32 %v177, %v177
  %v342 = vmul.f32 %v180, %v180
  %v343 = vmul.f32 %v185, %v185
  %v344 = vmul.f32 %v188, %v188
  %v345 = vmul.f32 %v193, %v193
  %v346 = vmul.f32 %v196, %v196
  %v347 = vmul.f32 %v201, %v201
  %v348 = vmul.f32 %v204, %v204
  %v349 = vmul.f32 %v209, %v209
  %v350 = vmul.f32 %v212, %v212
  %v351 = vmul.f32 %v217, %v217
  %v352 = vmul.f32 %v220, %v220
  %v353 = vmul.f32 %v225, %v225
  %v354 = vmul.f32 %v228, %v228
  %v355 = vmul.f32 %v233, %v233
  %v356 = vmul.f32 %v236, %v236
  %v357 = vadd.f32 %v341, %v342
  %v358 = vadd.f32 %v357, %v343
  %v359 = vadd.f32 %v358, %v344
  %v360 = vadd.f32 %v359, %v345
  %v361 = vadd.f32 %v360, %v346
  %v362 = vadd.f32 %v361, %v347
  %v363 = vadd.f32 %v362, %v348
  %v364 = vadd.f32 %v363, %v349
  %v365 = vadd.f32 %v364, %v350
  %v366 = vadd.f32 %v365, %v351
  %v367 = vadd.f32 %v366, %v352
  %v368 = vadd.f32 %v367, %v353
  %v369 = vadd.f32 %v368, %v354
  %v370 = vadd.f32 %v369, %v355
  %v371 = vadd.f32 %v370, %v356
  %v372 = vrot.slane %v371, 4
  %v373 = vadd.f32 %v371, %v372
  %v374 = vrot.slane %v373, 2
  %v375 = vadd.f32 %v373, %v374
  %v376 = vrot.slane %v375, 1
  %v377 = vadd.f32 %v375, %v376
  %378 = vst [vmem:[%s3 + $0x1] sm:$0x1] %v377
  // Predicated region
  $region10: #{residual_block.6} parent=0 // pred_check
    _
  $region11: #{residual_block.6} parent=0 // pred_check_branch
    %380 = sbr.rel (0) target = $region13
  $region12: #{residual_block.6} parent=0 // pred_region
    _
  $region13: #{residual_block.6} parent=0 // pred_fallthru
    _
  // Predicated region
  $region14: #{residual_block.6} parent=0 // pred_check
    _
  $region15: #{residual_block.6} parent=0 // pred_check_branch
    %382 = sbr.rel (0) target = $region17
  $region16: #{residual_block.6} parent=0 // pred_region
    _
  $region17: #{residual_block.6} parent=0 // pred_fallthru
    _
  // Predicated region
  $region18: #{residual_block.6} parent=0 // pred_check
    _
  $region19: #{residual_block.6} parent=0 // pred_check_branch
    %384 = sbr.rel (0) target = $region21
  $region20: #{residual_block.6} parent=0 // pred_region
    _
  $region21: #{residual_block.6} parent=0 // pred_fallthru
    _
  // Predicated region
  $region22: #{residual_block.6} parent=0 // pred_check
    _
  $region23: #{residual_block.6} parent=0 // pred_check_branch
    %386 = sbr.rel (0) target = $region25
  $region24: #{residual_block.6} parent=0 // pred_region
    _
  $region25: #{residual_block.6} parent=0 // pred_fallthru
    _

// kernel: residual_block.9
$region0: #{residual_block.9}
  #allocation0 [shape = 'u32[]', space=smem, size = 0x4, offset = 0x4, fixed_abs, tag = 'smem constant byte address 0x4 - core index']
  #allocation1 [shape = 'u32[144,128]{1,0:T(1,128)}', space=vmem, size = 0x12000, scoped, tag = 'internal scratch']
  %s0 = inlined_call_operand.vmem [shape: bf16[128,128], index: 0, kind: input, shape index: {}]
  %s1 = inlined_call_operand.vmem [shape: f32[1,128], index: 1, kind: input, shape index: {}]
  %s2 = inlined_call_operand.vmem [shape: f32[1,128], index: 2, kind: input, shape index: {}]
  %s3 = inlined_call_operand.vmem [shape: bf16[128,128], index: 3, kind: output, shape index: {}]
  %s4 = sld [smem:[#allocation0]]
  $region22: #{residual_block.9} parent=0
    _
  %s6 = ssub.s32 1, %s4
  %s7 = scalar_select 0, %s6, %s4
  // Predicated region
  $region2: #{residual_block.9} parent=0 // pred_check
    _
  $region3: #{residual_block.9} parent=0 // pred_check_branch
    %9 = sbr.rel (0) target = $region5
  $region4: #{residual_block.9} parent=0 // pred_region
    _
  $region5: #{residual_block.9} parent=0 // pred_fallthru
    _
  // Predicated region
  $region6: #{residual_block.9} parent=0 // pred_check
    _
  $region7: #{residual_block.9} parent=0 // pred_check_branch
    %11 = sbr.rel (0) target = $region9
  $region8: #{residual_block.9} parent=0 // pred_region
    _
  $region9: #{residual_block.9} parent=0 // pred_fallthru
    _
  // Predicated region
  $region10: #{residual_block.9} parent=0 // pred_check
    _
  $region11: #{residual_block.9} parent=0 // pred_check_branch
    %13 = sbr.rel (0) target = $region13
  $region12: #{residual_block.9} parent=0 // pred_region
    _
  $region13: #{residual_block.9} parent=0 // pred_fallthru
    _
  %v14 = vld [vmem:[%s0] sm:$0xf]
  %v15 = vld [vmem:[%s0 + $0x4] sm:$0xf]
  %v16 = vld [vmem:[%s0 + $0x8] sm:$0xf]
  %v17 = vld [vmem:[%s0 + $0xc] sm:$0xf]
  %v18 = vld [vmem:[%s0 + $0x10] sm:$0xf]
  %v19 = vld [vmem:[%s0 + $0x14] sm:$0xf]
  %v20 = vld [vmem:[%s0 + $0x18] sm:$0xf]
  %v21 = vld [vmem:[%s0 + $0x1c] sm:$0xf]
  %v22 = vld [vmem:[%s0 + $0x20] sm:$0xf]
  %v23 = vld [vmem:[%s0 + $0x24] sm:$0xf]
  %v24 = vld [vmem:[%s0 + $0x28] sm:$0xf]
  %v25 = vld [vmem:[%s0 + $0x2c] sm:$0xf]
  %v26 = vld [vmem:[%s0 + $0x30] sm:$0xf]
  %v27 = vld [vmem:[%s0 + $0x34] sm:$0xf]
  %v28 = vld [vmem:[%s0 + $0x38] sm:$0xf]
  %v29 = vld [vmem:[%s0 + $0x3c] sm:$0xf]
  %v30 = vunpack.c.l.bf16 %v14
  %v31 = vunpack.c.l.bf16 %v15
  %v32 = vunpack.c.l.bf16 %v16
  %v33 = vunpack.c.l.bf16 %v17
  %v34 = vunpack.c.l.bf16 %v18
  %v35 = vunpack.c.l.bf16 %v19
  %v36 = vunpack.c.l.bf16 %v20
  %v37 = vunpack.c.l.bf16 %v21
  %v38 = vunpack.c.l.bf16 %v22
  %v39 = vunpack.c.l.bf16 %v23
  %v40 = vunpack.c.l.bf16 %v24
  %v41 = vunpack.c.l.bf16 %v25
  %v42 = vunpack.c.l.bf16 %v26
  %v43 = vunpack.c.l.bf16 %v27
  %v44 = vunpack.c.l.bf16 %v28
  %v45 = vunpack.c.l.bf16 %v29
  %v46 = vld [vmem:[%s1] sm:$0x1]
  %v48 = vlaneseq
  %v49 = vshrl.u32 %v48, 7
  %v50 = vsub.s32 0, %v49
  %v51 = vrot.slane %v46, %v50
  %v53 = vmul.f32 %v30, %v51
  %v54 = vmul.f32 %v31, %v51
  %v55 = vmul.f32 %v32, %v51
  %v56 = vmul.f32 %v33, %v51
  %v57 = vmul.f32 %v34, %v51
  %v58 = vmul.f32 %v35, %v51
  %v59 = vmul.f32 %v36, %v51
  %v60 = vmul.f32 %v37, %v51
  %v61 = vmul.f32 %v38, %v51
  %v62 = vmul.f32 %v39, %v51
  %v63 = vmul.f32 %v40, %v51
  %v64 = vmul.f32 %v41, %v51
  %v65 = vmul.f32 %v42, %v51
  %v66 = vmul.f32 %v43, %v51
  %v67 = vmul.f32 %v44, %v51
  %v68 = vmul.f32 %v45, %v51
  %v69 = vld [vmem:[%s2] sm:$0x1]
  %v71 = vlaneseq
  %v72 = vshrl.u32 %v71, 7
  %v73 = vsub.s32 0, %v72
  %v74 = vrot.slane %v69, %v73
  %v76 = vadd.f32 %v53, %v74
  %v77 = vadd.f32 %v54, %v74
  %v78 = vadd.f32 %v55, %v74
  %v79 = vadd.f32 %v56, %v74
  %v80 = vadd.f32 %v57, %v74
  %v81 = vadd.f32 %v58, %v74
  %v82 = vadd.f32 %v59, %v74
  %v83 = vadd.f32 %v60, %v74
  %v84 = vadd.f32 %v61, %v74
  %v85 = vadd.f32 %v62, %v74
  %v86 = vadd.f32 %v63, %v74
  %v87 = vadd.f32 %v64, %v74
  %v88 = vadd.f32 %v65, %v74
  %v89 = vadd.f32 %v66, %v74
  %v90 = vadd.f32 %v67, %v74
  %v91 = vadd.f32 %v68, %v74
  %v92 = vpack.c.bf16 %v77, %v76
  %v93 = vpack.c.bf16 %v79, %v78
  %v94 = vpack.c.bf16 %v81, %v80
  %v95 = vpack.c.bf16 %v83, %v82
  %v96 = vpack.c.bf16 %v85, %v84
  %v97 = vpack.c.bf16 %v87, %v86
  %v98 = vpack.c.bf16 %v89, %v88
  %v99 = vpack.c.bf16 %v91, %v90
  %v108 = vunpack.c.l.b16 %v92
  %v109 = vunpack.c.h.b16 %v92
  %v110 = vunpack.c.l.b16 %v93
  %v111 = vunpack.c.h.b16 %v93
  %v112 = vunpack.c.l.b16 %v94
  %v113 = vunpack.c.h.b16 %v94
  %v114 = vunpack.c.l.b16 %v95
  %v115 = vunpack.c.h.b16 %v95
  %v116 = vunpack.c.l.b16 %v96
  %v117 = vunpack.c.h.b16 %v96
  %v118 = vunpack.c.l.b16 %v97
  %v119 = vunpack.c.h.b16 %v97
  %v120 = vunpack.c.l.b16 %v98
  %v121 = vunpack.c.h.b16 %v98
  %v122 = vunpack.c.l.b16 %v99
  %v123 = vunpack.c.h.b16 %v99
  %v124 = vpack.c.b16 %v108, %v108
  %v125 = vpack.c.b16 %v109, %v109
  %v126 = vpack.c.b16 %v110, %v110
  %v127 = vpack.c.b16 %v111, %v111
  %v128 = vpack.c.b16 %v112, %v112
  %v129 = vpack.c.b16 %v113, %v113
  %v130 = vpack.c.b16 %v114, %v114
  %v131 = vpack.c.b16 %v115, %v115
  %v132 = vpack.c.b16 %v116, %v116
  %v133 = vpack.c.b16 %v117, %v117
  %v134 = vpack.c.b16 %v118, %v118
  %v135 = vpack.c.b16 %v119, %v119
  %v136 = vpack.c.b16 %v120, %v120
  %v137 = vpack.c.b16 %v121, %v121
  %v138 = vpack.c.b16 %v122, %v122
  %v139 = vpack.c.b16 %v123, %v123
  %156 = vst [vmem:[%s3] sm:$0xf] %v124
  %157 = vst [vmem:[%s3 + $0x4] sm:$0xf] %v125
  %158 = vst [vmem:[%s3 + $0x8] sm:$0xf] %v126
  %159 = vst [vmem:[%s3 + $0xc] sm:$0xf] %v127
  %160 = vst [vmem:[%s3 + $0x10] sm:$0xf] %v128
  %161 = vst [vmem:[%s3 + $0x14] sm:$0xf] %v129
  %162 = vst [vmem:[%s3 + $0x18] sm:$0xf] %v130
  %163 = vst [vmem:[%s3 + $0x1c] sm:$0xf] %v131
  %164 = vst [vmem:[%s3 + $0x20] sm:$0xf] %v132
  %165 = vst [vmem:[%s3 + $0x24] sm:$0xf] %v133
  %166 = vst [vmem:[%s3 + $0x28] sm:$0xf] %v134
  %167 = vst [vmem:[%s3 + $0x2c] sm:$0xf] %v135
  %168 = vst [vmem:[%s3 + $0x30] sm:$0xf] %v136
  %169 = vst [vmem:[%s3 + $0x34] sm:$0xf] %v137
  %170 = vst [vmem:[%s3 + $0x38] sm:$0xf] %v138
  %171 = vst [vmem:[%s3 + $0x3c] sm:$0xf] %v139
  // Predicated region
  $region14: #{residual_block.9} parent=0 // pred_check
    _
  $region15: #{residual_block.9} parent=0 // pred_check_branch
    %173 = sbr.rel (0) target = $region17
  $region16: #{residual_block.9} parent=0 // pred_region
    _
  $region17: #{residual_block.9} parent=0 // pred_fallthru
    _
  // Predicated region
  $region18: #{residual_block.9} parent=0 // pred_check
    _
  $region19: #{residual_block.9} parent=0 // pred_check_branch
    %175 = sbr.rel (0) target = $region21
  $region20: #{residual_block.9} parent=0 // pred_region
    _
  $region21: #{residual_block.9} parent=0 // pred_fallthru
    _

// kernel: residual_block.11
$region0: #{residual_block.11}
  #allocation0 [shape = 'u32[]', space=smem, size = 0x4, offset = 0x4, fixed_abs, tag = 'smem constant byte address 0x4 - core index']
  #allocation1 [shape = 'u32[144,128]{1,0:T(1,128)}', space=vmem, size = 0x12000, scoped, tag = 'internal scratch']
  %s0 = inlined_call_operand.vmem [shape: bf16[128,128], index: 0, kind: input, shape index: {}]
  %s1 = inlined_call_operand.vmem [shape: f32[1,128], index: 1, kind: input, shape index: {}]
  %s2 = inlined_call_operand.vmem [shape: f32[1,128], index: 2, kind: input, shape index: {}]
  %s3 = inlined_call_operand.vmem [shape: bf16[128,128], index: 3, kind: input, shape index: {}]
  %s4 = inlined_call_operand.vmem [shape: f32[128,128], index: 4, kind: output, shape index: {}]
  %s5 = sld [smem:[#allocation0]]
  $region26: #{residual_block.11} parent=0
    _
  %s7 = ssub.s32 1, %s5
  %s8 = scalar_select 0, %s7, %s5
  // Predicated region
  $region2: #{residual_block.11} parent=0 // pred_check
    _
  $region3: #{residual_block.11} parent=0 // pred_check_branch
    %10 = sbr.rel (0) target = $region5
  $region4: #{residual_block.11} parent=0 // pred_region
    _
  $region5: #{residual_block.11} parent=0 // pred_fallthru
    _
  // Predicated region
  $region6: #{residual_block.11} parent=0 // pred_check
    _
  $region7: #{residual_block.11} parent=0 // pred_check_branch
    %12 = sbr.rel (0) target = $region9
  $region8: #{residual_block.11} parent=0 // pred_region
    _
  $region9: #{residual_block.11} parent=0 // pred_fallthru
    _
  // Predicated region
  $region10: #{residual_block.11} parent=0 // pred_check
    _
  $region11: #{residual_block.11} parent=0 // pred_check_branch
    %14 = sbr.rel (0) target = $region13
  $region12: #{residual_block.11} parent=0 // pred_region
    _
  $region13: #{residual_block.11} parent=0 // pred_fallthru
    _
  // Predicated region
  $region14: #{residual_block.11} parent=0 // pred_check
    _
  $region15: #{residual_block.11} parent=0 // pred_check_branch
    %16 = sbr.rel (0) target = $region17
  $region16: #{residual_block.11} parent=0 // pred_region
    _
  $region17: #{residual_block.11} parent=0 // pred_fallthru
    _
  %v17 = vld [vmem:[%s0] sm:$0xf]
  %v18 = vld [vmem:[%s0 + $0x4] sm:$0xf]
  %v19 = vld [vmem:[%s0 + $0x8] sm:$0xf]
  %v20 = vld [vmem:[%s0 + $0xc] sm:$0xf]
  %v21 = vld [vmem:[%s0 + $0x10] sm:$0xf]
  %v22 = vld [vmem:[%s0 + $0x14] sm:$0xf]
  %v23 = vld [vmem:[%s0 + $0x18] sm:$0xf]
  %v24 = vld [vmem:[%s0 + $0x1c] sm:$0xf]
  %v25 = vld [vmem:[%s0 + $0x20] sm:$0xf]
  %v26 = vld [vmem:[%s0 + $0x24] sm:$0xf]
  %v27 = vld [vmem:[%s0 + $0x28] sm:$0xf]
  %v28 = vld [vmem:[%s0 + $0x2c] sm:$0xf]
  %v29 = vld [vmem:[%s0 + $0x30] sm:$0xf]
  %v30 = vld [vmem:[%s0 + $0x34] sm:$0xf]
  %v31 = vld [vmem:[%s0 + $0x38] sm:$0xf]
  %v32 = vld [vmem:[%s0 + $0x3c] sm:$0xf]
  %v33 = vunpack.c.l.bf16 %v17
  %v34 = vunpack.c.l.bf16 %v18
  %v35 = vunpack.c.l.bf16 %v19
  %v36 = vunpack.c.l.bf16 %v20
  %v37 = vunpack.c.l.bf16 %v21
  %v38 = vunpack.c.l.bf16 %v22
  %v39 = vunpack.c.l.bf16 %v23
  %v40 = vunpack.c.l.bf16 %v24
  %v41 = vunpack.c.l.bf16 %v25
  %v42 = vunpack.c.l.bf16 %v26
  %v43 = vunpack.c.l.bf16 %v27
  %v44 = vunpack.c.l.bf16 %v28
  %v45 = vunpack.c.l.bf16 %v29
  %v46 = vunpack.c.l.bf16 %v30
  %v47 = vunpack.c.l.bf16 %v31
  %v48 = vunpack.c.l.bf16 %v32
  %v49 = vld [vmem:[%s1] sm:$0x1]
  %v51 = vlaneseq
  %v52 = vshrl.u32 %v51, 7
  %v53 = vsub.s32 0, %v52
  %v54 = vrot.slane %v49, %v53
  %v56 = vmul.f32 %v33, %v54
  %v57 = vmul.f32 %v34, %v54
  %v58 = vmul.f32 %v35, %v54
  %v59 = vmul.f32 %v36, %v54
  %v60 = vmul.f32 %v37, %v54
  %v61 = vmul.f32 %v38, %v54
  %v62 = vmul.f32 %v39, %v54
  %v63 = vmul.f32 %v40, %v54
  %v64 = vmul.f32 %v41, %v54
  %v65 = vmul.f32 %v42, %v54
  %v66 = vmul.f32 %v43, %v54
  %v67 = vmul.f32 %v44, %v54
  %v68 = vmul.f32 %v45, %v54
  %v69 = vmul.f32 %v46, %v54
  %v70 = vmul.f32 %v47, %v54
  %v71 = vmul.f32 %v48, %v54
  %v72 = vld [vmem:[%s2] sm:$0x1]
  %v74 = vlaneseq
  %v75 = vshrl.u32 %v74, 7
  %v76 = vsub.s32 0, %v75
  %v77 = vrot.slane %v72, %v76
  %v79 = vadd.f32 %v56, %v77
  %v80 = vadd.f32 %v57, %v77
  %v81 = vadd.f32 %v58, %v77
  %v82 = vadd.f32 %v59, %v77
  %v83 = vadd.f32 %v60, %v77
  %v84 = vadd.f32 %v61, %v77
  %v85 = vadd.f32 %v62, %v77
  %v86 = vadd.f32 %v63, %v77
  %v87 = vadd.f32 %v64, %v77
  %v88 = vadd.f32 %v65, %v77
  %v89 = vadd.f32 %v66, %v77
  %v90 = vadd.f32 %v67, %v77
  %v91 = vadd.f32 %v68, %v77
  %v92 = vadd.f32 %v69, %v77
  %v93 = vadd.f32 %v70, %v77
  %v94 = vadd.f32 %v71, %v77
  %v95 = vld [vmem:[%s3] sm:$0xf]
  %v96 = vld [vmem:[%s3 + $0x4] sm:$0xf]
  %v97 = vld [vmem:[%s3 + $0x8] sm:$0xf]
  %v98 = vld [vmem:[%s3 + $0xc] sm:$0xf]
  %v99 = vld [vmem:[%s3 + $0x10] sm:$0xf]
  %v100 = vld [vmem:[%s3 + $0x14] sm:$0xf]
  %v101 = vld [vmem:[%s3 + $0x18] sm:$0xf]
  %v102 = vld [vmem:[%s3 + $0x1c] sm:$0xf]
  %v103 = vld [vmem:[%s3 + $0x20] sm:$0xf]
  %v104 = vld [vmem:[%s3 + $0x24] sm:$0xf]
  %v105 = vld [vmem:[%s3 + $0x28] sm:$0xf]
  %v106 = vld [vmem:[%s3 + $0x2c] sm:$0xf]
  %v107 = vld [vmem:[%s3 + $0x30] sm:$0xf]
  %v108 = vld [vmem:[%s3 + $0x34] sm:$0xf]
  %v109 = vld [vmem:[%s3 + $0x38] sm:$0xf]
  %v110 = vld [vmem:[%s3 + $0x3c] sm:$0xf]
  %v111 = vunpack.c.l.bf16 %v95
  %v112 = vunpack.c.l.bf16 %v96
  %v113 = vunpack.c.l.bf16 %v97
  %v114 = vunpack.c.l.bf16 %v98
  %v115 = vunpack.c.l.bf16 %v99
  %v116 = vunpack.c.l.bf16 %v100
  %v117 = vunpack.c.l.bf16 %v101
  %v118 = vunpack.c.l.bf16 %v102
  %v119 = vunpack.c.l.bf16 %v103
  %v120 = vunpack.c.l.bf16 %v104
  %v121 = vunpack.c.l.bf16 %v105
  %v122 = vunpack.c.l.bf16 %v106
  %v123 = vunpack.c.l.bf16 %v107
  %v124 = vunpack.c.l.bf16 %v108
  %v125 = vunpack.c.l.bf16 %v109
  %v126 = vunpack.c.l.bf16 %v110
  %v127 = vadd.f32 %v79, %v111
  %v128 = vadd.f32 %v80, %v112
  %v129 = vadd.f32 %v81, %v113
  %v130 = vadd.f32 %v82, %v114
  %v131 = vadd.f32 %v83, %v115
  %v132 = vadd.f32 %v84, %v116
  %v133 = vadd.f32 %v85, %v117
  %v134 = vadd.f32 %v86, %v118
  %v135 = vadd.f32 %v87, %v119
  %v136 = vadd.f32 %v88, %v120
  %v137 = vadd.f32 %v89, %v121
  %v138 = vadd.f32 %v90, %v122
  %v139 = vadd.f32 %v91, %v123
  %v140 = vadd.f32 %v92, %v124
  %v141 = vadd.f32 %v93, %v125
  %v142 = vadd.f32 %v94, %v126
  %v143 = vmax.f32 %v127, 0.0
  %v144 = vmax.f32 %v128, 0.0
  %v145 = vmax.f32 %v129, 0.0
  %v146 = vmax.f32 %v130, 0.0
  %v147 = vmax.f32 %v131, 0.0
  %v148 = vmax.f32 %v132, 0.0
  %v149 = vmax.f32 %v133, 0.0
  %v150 = vmax.f32 %v134, 0.0
  %v151 = vmax.f32 %v135, 0.0
  %v152 = vmax.f32 %v136, 0.0
  %v153 = vmax.f32 %v137, 0.0
  %v154 = vmax.f32 %v138, 0.0
  %v155 = vmax.f32 %v139, 0.0
  %v156 = vmax.f32 %v140, 0.0
  %v157 = vmax.f32 %v141, 0.0
  %v158 = vmax.f32 %v142, 0.0
  %159 = vst [vmem:[%s4] sm:$0xff] %v143
  %160 = vst [vmem:[%s4 + $0x8] sm:$0xff] %v144
  %161 = vst [vmem:[%s4 + $0x10] sm:$0xff] %v145
  %162 = vst [vmem:[%s4 + $0x18] sm:$0xff] %v146
  %163 = vst [vmem:[%s4 + $0x20] sm:$0xff] %v147
  %164 = vst [vmem:[%s4 + $0x28] sm:$0xff] %v148
  %165 = vst [vmem:[%s4 + $0x30] sm:$0xff] %v149
  %166 = vst [vmem:[%s4 + $0x38] sm:$0xff] %v150
  %167 = vst [vmem:[%s4 + $0x40] sm:$0xff] %v151
  %168 = vst [vmem:[%s4 + $0x48] sm:$0xff] %v152
  %169 = vst [vmem:[%s4 + $0x50] sm:$0xff] %v153
  %170 = vst [vmem:[%s4 + $0x58] sm:$0xff] %v154
  %171 = vst [vmem:[%s4 + $0x60] sm:$0xff] %v155
  %172 = vst [vmem:[%s4 + $0x68] sm:$0xff] %v156
  %173 = vst [vmem:[%s4 + $0x70] sm:$0xff] %v157
  %174 = vst [vmem:[%s4 + $0x78] sm:$0xff] %v158
  // Predicated region
  $region18: #{residual_block.11} parent=0 // pred_check
    _
  $region19: #{residual_block.11} parent=0 // pred_check_branch
    %176 = sbr.rel (0) target = $region21
  $region20: #{residual_block.11} parent=0 // pred_region
    _
  $region21: #{residual_block.11} parent=0 // pred_fallthru
    _
  // Predicated region
  $region22: #{residual_block.11} parent=0 // pred_check
    _
  $region23: #{residual_block.11} parent=0 // pred_check_branch
    %178 = sbr.rel (0) target = $region25
  $region24: #{residual_block.11} parent=0 // pred_region
    _
  $region25: #{residual_block.11} parent=0 // pred_fallthru
    _

</llo_original>
